<compile_context>
chip_gen: v7x
topology: tpu7x:2x2x1
jax: 0.10.0
libtpu: 0.0.40
codegen_flags: <defaults>
</compile_context>

<pallas_src>
import functools
import re

import jax
import jax.numpy as jnp
from jax import lax
from jax.experimental import pallas as pl
from jax.experimental.pallas import tpu as pltpu

LRELU_SLOPE = 0.1


def get_padding(kernel_size, dilation=1):
    return (kernel_size * dilation - dilation) // 2


def _round_up(x, m):
    return -(-x // m) * m


# ---------------------------------------------------------------------------
# Per-generation tuning knobs.
# ---------------------------------------------------------------------------
@functools.lru_cache(None)
def _chip_generation():
    try:
        kind = jax.devices()[0].device_kind.lower()
    except Exception:
        return 0
    m = re.search(r"(\d+)", kind)
    return int(m.group(1)) if m else 0


def _vmem_limit(gen):
    if gen >= 7:
        return 48 * 1024 * 1024        # v7x: 64 MiB physical per TensorCore
    if gen >= 2:
        return 100 * 1024 * 1024       # v2..v6: 128 MiB physical
    return 48 * 1024 * 1024


def _pad_ch(c, gen):
    """Lane/contraction-align big channel counts (1048 -> 1280 on v6e/v7x, 1152 on v5e)."""
    if c <= 128:
        return c
    align = 256 if gen >= 6 else 128
    return c if c % align == 0 else _round_up(c, align)


def _pick_cout_tile(c_out, gen):
    if c_out % 128 != 0:
        return c_out
    if gen >= 7:
        cands = (640, 512, 256, 128)    # even tile count, full-width 256-wide MXU passes
    elif gen == 6:
        cands = (512, 256, 384, 128)
    else:
        cands = (512, 384, 256, 128)    # v5e: 4x128x128 MXUs, 384 = 3*128
    for t in cands:
        if c_out % t == 0:
            return t
    return c_out


def _pick_m_tile(m, gen):
    cap = 2048 if gen >= 7 else 4096
    if m <= cap:
        return m
    n_t = -(-m // cap)
    tm = -(-m // n_t)
    return _round_up(tm, 16)            # bf16 sublane packing


@functools.lru_cache(None)
def _single_buffer_ok():
    """Probe once whether pipeline_mode=pl.Buffered(1) is supported here."""
    try:
        def k(x_ref, o_ref):
            o_ref[...] = x_ref[...] * 2.0

        spec = pl.BlockSpec((16, 128), lambda i: (0, 0), pipeline_mode=pl.Buffered(1))
        f = pl.pallas_call(
            k,
            out_shape=jax.ShapeDtypeStruct((16, 128), jnp.float32),
            grid=(2,),
            in_specs=[spec],
            out_specs=pl.BlockSpec((8, 128), lambda i: (i, 0)),
        )
        jax.block_until_ready(f(jnp.ones((16, 128), jnp.float32)))
        return True
    except Exception:
        return False


def _resident_spec(shape, index_map):
    """BlockSpec for a block whose index never changes across the grid: single-buffered."""
    if _single_buffer_ok():
        return pl.BlockSpec(shape, index_map, pipeline_mode=pl.Buffered(1))
    return pl.BlockSpec(shape, index_map)


# ---------------------------------------------------------------------------
# Generic conv along H with a (K, 1) kernel, fused bias + leaky-relu.
# grid = (C_out tiles, M tiles), both "parallel"; f32 VMEM scratch accumulator.
# ---------------------------------------------------------------------------
def _conv_kernel(x_ref, w_ref, b_ref, o_ref, acc_ref, *, taps, starts, tm, m_tiled,
                 neg_slope):
    # x_ref: (R_in, C_in) whole activation slab (single-buffered, constant index map)
    # w_ref: (K, C_in, TCout)   b_ref: (1, TCout)   o_ref / acc_ref: (TM, TCout)
    if m_tiled:
        row0 = pl.multiple_of(pl.program_id(1) * tm, tm)
    else:
        row0 = 0
    acc_ref[...] = jnp.zeros_like(acc_ref)
    for kk in range(taps):                          # static unroll over taps (K <= 5)
        xs = x_ref[pl.ds(starts[kk] + row0, tm), :]
        acc_ref[...] += jnp.dot(xs, w_ref[kk], preferred_element_type=jnp.float32)
    acc = acc_ref[...] + b_ref[...]
    if neg_slope is not None:
        acc = jnp.where(acc >= 0.0, acc, acc * neg_slope)
    o_ref[...] = acc.astype(o_ref.dtype)


def _prep_rows(a2, n_cols, h, pad, stride):
    """Zero-pad along H and (for stride>1) regroup rows by h%stride so every conv tap
    becomes one contiguous slice.  a2: (h*n_cols, c), rows ordered h-major."""
    c = a2.shape[1]
    h_pad = h + 2 * pad
    if stride > 1:
        g = -(-h_pad // stride)          # cdiv
        h_grp = g * stride
    else:
        g, h_grp = h_pad, h_pad
    extra = h_grp - h_pad
    a2 = jnp.pad(a2, ((pad * n_cols, (pad + extra) * n_cols), (0, 0)))
    if stride > 1:
        a2 = (a2.reshape(g, stride, n_cols, c)
                .transpose(1, 0, 2, 3)
                .reshape(h_grp * n_cols, c))
    return a2, g


def conv_h(x2, w_k, b2, *, n_cols, h, stride, pad, neg_slope, gen):
    """x2: (h*n_cols, C_in) bf16; w_k: (K, C_in, C_out) bf16; b2: (1, C_out) f32."""
    c_in = x2.shape[1]
    k, _, c_out = w_k.shape
    h_pad = h + 2 * pad
    h_out = (h_pad - k) // stride + 1
    xp, g = _prep_rows(x2, n_cols, h, pad, stride)
    m = h_out * n_cols
    starts = tuple(((kk % stride) * g + kk // stride) * n_cols for kk in range(k))

    cout_tile = _pick_cout_tile(c_out, gen)
    n_ct = c_out // cout_tile
    tm = _pick_m_tile(m, gen)
    n_mt = -(-m // tm)
    m_pad = n_mt * tm

    # Extra zero rows so tap reads for the (sliced-off) padded output rows stay in bounds.
    need_rows = max(starts) + m_pad
    if need_rows > xp.shape[0]:
        xp = jnp.pad(xp, ((0, need_rows - xp.shape[0]), (0, 0)))
    r_in = xp.shape[0]

    kernel = functools.partial(_conv_kernel, taps=k, starts=starts, tm=tm,
                               m_tiled=(n_mt > 1), neg_slope=neg_slope)
    out = pl.pallas_call(
        kernel,
        out_shape=jax.ShapeDtypeStruct((m_pad, c_out), x2.dtype),
        grid=(n_ct, n_mt),                            # C_out outer -> each weight tile DMA'd once
        in_specs=[
            _resident_spec((r_in, c_in), lambda j, i: (0, 0)),          # whole activation slab
            pl.BlockSpec((k, c_in, cout_tile), lambda j, i: (0, 0, j)),  # C_out-tiled weight
            pl.BlockSpec((1, cout_tile), lambda j, i: (0, j)),           # bias tile
        ],
        out_specs=pl.BlockSpec((tm, cout_tile), lambda j, i: (i, j)),
        scratch_shapes=[pltpu.VMEM((tm, cout_tile), jnp.float32)],
        compiler_params=pltpu.CompilerParams(
            dimension_semantics=("parallel", "parallel"),
            vmem_limit_bytes=_vmem_limit(gen)),
    )(xp, w_k, b2)
    if m_pad != m:
        out = out[:m]
    return out, h_out


# ---------------------------------------------------------------------------
# Fused head: h2r Conv2d(1, 4, (3,1), pad 1) + QuaternionConv2d(4, 32, (5,1), stride 3,
# pad 2) + leaky-relu in one pallas_call.  The 4-channel intermediate lives only in a
# VMEM scratch, already laid out in the stride-3-regrouped order stage B consumes.
# ---------------------------------------------------------------------------
def _fused_head_kernel(x_ref, w0_ref, b0_ref, w1_ref, b1_ref, o_ref, areg_ref, *,
                       n_cols, g1, g1x, h, h1, neg_slope):
    rows_a = g1 * n_cols
    ridx = lax.broadcasted_iota(jnp.int32, (rows_a, 1), 0)

    # Stage A: h2r.  Scratch group r, slot s holds the (zero-padded) layer-1 input at
    # padded-H position q = 3*s + r, i.e. A[q-2] inside [0, h) and exactly 0 outside.
    for r in range(3):
        acc = jnp.zeros((rows_a, areg_ref.shape[1]), jnp.float32)
        for jj in range(3):
            d = r + jj
            startx = ((d % 3) * g1x + d // 3) * n_cols
            xs = x_ref[pl.ds(startx, rows_a), :]
            acc = acc + xs.astype(jnp.float32) * w0_ref[jj].astype(jnp.float32)
        acc = acc + b0_ref[...]
        s_lo = -(-(2 - r) // 3)                       # first valid slot (ceil((2-r)/3))
        s_hi = min(g1, (h + 4 - r) // 3)              # one past the last valid slot
        valid = jnp.logical_and(ridx >= s_lo * n_cols, ridx < s_hi * n_cols)
        areg_ref[pl.ds(r * rows_a, rows_a), :] = (
            jnp.where(valid, acc, 0.0).astype(areg_ref.dtype))

    # Stage B: 4 -> 32 quaternion conv, stride 3, k = 5, then leaky-relu.
    m = h1 * n_cols
    acc = jnp.zeros((m, o_ref.shape[1]), jnp.float32)
    for kk in range(5):
        startb = ((kk % 3) * g1 + kk // 3) * n_cols
        a_s = areg_ref[pl.ds(startb, m), :]
        acc = acc + jnp.dot(a_s, w1_ref[kk], preferred_element_type=jnp.float32)
    acc = acc + b1_ref[...]
    acc = jnp.where(acc >= 0.0, acc, acc * neg_slope)
    o_ref[...] = acc.astype(o_ref.dtype)


def fused_head(x2, fp, *, n_cols, h, gen):
    """x2: (h*n_cols, 1) bf16 -> first quaternion conv activation, (H1*n_cols, 32) bf16."""
    h1 = (h - 1) // 3 + 1               # output H of the first quaternion conv
    g1 = h1 + 1                         # slots per regrouped intermediate group
    g1x = g1 + 1                        # slots per regrouped input group
    # xext[v] = x[v - 3] (zero outside [0, h)), v in [0, 3*g1x); regrouped by v % 3.
    total = 3 * g1x
    xext = jnp.pad(x2, ((3 * n_cols, (total - 3 - h) * n_cols), (0, 0)))
    xreg = (xext.reshape(g1x, 3, n_cols, 1)
                .transpose(1, 0, 2, 3)
                .reshape(total * n_cols, 1))
    rows_x = total * n_cols
    rows_a = 3 * g1 * n_cols
    m = h1 * n_cols
    c1 = fp["w1"].shape[2]

    kernel = functools.partial(_fused_head_kernel, n_cols=n_cols, g1=g1, g1x=g1x,
                               h=h, h1=h1, neg_slope=LRELU_SLOPE)
    out = pl.pallas_call(
        kernel,
        out_shape=jax.ShapeDtypeStruct((m, c1), x2.dtype),
        grid=(1,),
        in_specs=[
            _resident_spec((rows_x, 1), lambda i: (0, 0)),
            pl.BlockSpec(fp["w0"].shape, lambda i: (0, 0, 0)),
            pl.BlockSpec(fp["b0"].shape, lambda i: (0, 0)),
            pl.BlockSpec(fp["w1"].shape, lambda i: (0, 0, 0)),
            pl.BlockSpec(fp["b1"].shape, lambda i: (0, 0)),
        ],
        out_specs=pl.BlockSpec((m, c1), lambda i: (0, 0)),
        scratch_shapes=[pltpu.VMEM((rows_a, fp["b0"].shape[1]), jnp.bfloat16)],
        compiler_params=pltpu.CompilerParams(
            dimension_semantics=("arbitrary",),
            vmem_limit_bytes=_vmem_limit(gen)),
    )(xreg, fp["w0"], fp["b0"], fp["w1"], fp["b1"])
    return out, h1


# ---------------------------------------------------------------------------
# Deterministic synthetic parameters (torch layout, f32).
# ---------------------------------------------------------------------------
def init_plain_conv(key, c_out, c_in, k):
    kw, kb = jax.random.split(key)
    scale = 1.0 / jnp.sqrt(c_in * k)
    w = jax.random.normal(kw, (c_out, c_in, k), jnp.float32) * scale   # (O, I, KH), KW=1
    b = jax.random.normal(kb, (c_out,), jnp.float32) * 0.01
    return w, b


def init_quat_conv(key, c_out, c_in, k):
    """QuaternionConv2d weight: Hamilton product of 4 component kernels."""
    ks = jax.random.split(key, 5)
    co4, ci4 = c_out // 4, c_in // 4
    scale = 1.0 / jnp.sqrt(c_in * k)
    r, i, j, q = (jax.random.normal(ks[m], (co4, ci4, k), jnp.float32) * scale
                  for m in range(4))
    b = jax.random.normal(ks[4], (c_out,), jnp.float32) * 0.01
    row_r = jnp.concatenate([r, -i, -j, -q], axis=1)
    row_i = jnp.concatenate([i,  r, -q,  j], axis=1)
    row_j = jnp.concatenate([j,  q,  r, -i], axis=1)
    row_q = jnp.concatenate([q, -j,  i,  r], axis=1)
    w = jnp.concatenate([row_r, row_i, row_j, row_q], axis=0)          # (O, I, KH)
    return w, b


def make_params(key, kernel_size=5, stride=3):
    keys = jax.random.split(key, 7)
    layers = []
    # h2r: Conv2d(1, 4, (3,1), 1, padding=(1,0)) -- no activation after it
    w, b = init_plain_conv(keys[0], 4, 1, 3)
    layers.append(dict(w=w, b=b, stride=1, pad=1, act=None))
    # Quaternion convs (leaky-relu after each)
    chans = [(4, 32), (32, 128), (128, 512), (512, 1048)]
    for idx, (ci, co) in enumerate(chans):
        w, b = init_quat_conv(keys[1 + idx], co, ci, kernel_size)
        layers.append(dict(w=w, b=b, stride=stride,
                           pad=get_padding(kernel_size, 1), act=LRELU_SLOPE))
    w, b = init_quat_conv(keys[5], 1048, 1048, kernel_size)
    layers.append(dict(w=w, b=b, stride=1, pad=2, act=LRELU_SLOPE))
    # conv_post: Conv2d(1048, 1, (3,1), 1, padding=(1,0)) -- no activation
    w, b = init_plain_conv(keys[6], 1, 1048, 3)
    layers.append(dict(w=w, b=b, stride=1, pad=1, act=None))
    return layers


def prepare_pallas_params(layers, gen=None):
    """One-time conversion to kernel layout.  layers[0]+layers[1] are packed for the fused
    head kernel; the remaining layers become (K, C_in_pad, C_out_pad) bf16 weights and
    (1, C_out_pad) f32 bias.  Channel padding is zero-filled (padded lanes stay 0)."""
    if gen is None:
        gen = _chip_generation()

    l0, l1 = layers[0], layers[1]
    assert l0["stride"] == 1 and l0["pad"] == 1 and l0["w"].shape[2] == 3
    assert l1["stride"] == 3 and l1["pad"] == 2 and l1["w"].shape[2] == 5
    c0, c0p = l0["w"].shape[0], 8
    w0 = jnp.pad(jnp.transpose(l0["w"], (2, 1, 0)),
                 ((0, 0), (0, 0), (0, c0p - c0))).astype(jnp.bfloat16)       # (3, 1, 8)
    b0 = jnp.pad(l0["b"], (0, c0p - c0)).reshape(1, c0p).astype(jnp.float32)
    c1 = l1["w"].shape[0]
    w1 = jnp.pad(jnp.transpose(l1["w"], (2, 1, 0)),
                 ((0, 0), (0, c0p - c0), (0, 0))).astype(jnp.bfloat16)       # (5, 8, 32)
    b1 = l1["b"].reshape(1, c1).astype(jnp.float32)
    fused = dict(w0=w0, b0=b0, w1=w1, b1=b1, c_out=c1)

    tail = []
    n_layers = len(layers)
    for idx in range(2, n_layers):
        l = layers[idx]
        w, b = l["w"], l["b"]                       # (O, I, K), (O,)
        o, i, k = w.shape
        i_pad = _pad_ch(i, gen)
        o_pad = 128 if idx == n_layers - 1 else _pad_ch(o, gen)   # conv_post: lane-dense out
        wk = jnp.transpose(w, (2, 1, 0))            # (K, I, O)
        wk = jnp.pad(wk, ((0, 0), (0, i_pad - i), (0, o_pad - o))).astype(jnp.bfloat16)
        bb = jnp.pad(b, (0, o_pad - o)).reshape(1, o_pad).astype(jnp.float32)
        tail.append(dict(w=wk, b=bb, stride=l["stride"], pad=l["pad"],
                         act=l["act"], c_out=o))
    return dict(fused=fused, tail=tail, gen=gen)


# ---------------------------------------------------------------------------
# Forward passes.
# ---------------------------------------------------------------------------
def qdiscriminator_p_pallas(x, prepped, period):
    gen = prepped["gen"]
    b, c, t = x.shape
    if t % period != 0:
        n_pad = period - t % period
        x = jnp.pad(x, ((0, 0), (0, 0), (0, n_pad)), mode="reflect")
        t = t + n_pad
    h = t // period
    n_cols = b * period
    x4 = x.reshape(b, c, h, period)                                   # NCHW
    # (H, b, P, C) -> (H*N, C) with row = h*N + (bi*P + w)
    cur = jnp.transpose(x4, (2, 0, 3, 1)).reshape(h * n_cols, c).astype(jnp.bfloat16)

    def to_nchw(a2, hh, cc):
        return jnp.transpose(a2.reshape(hh, b, period, cc), (1, 3, 0, 2))

    fmap = []
    # Fused h2r + first quaternion conv: the 4-channel intermediate never touches HBM.
    cur, cur_h = fused_head(cur, prepped["fused"], n_cols=n_cols, h=h, gen=gen)
    fmap.append(to_nchw(cur.astype(jnp.float32), cur_h, prepped["fused"]["c_out"]))

    tail = prepped["tail"]
    for li, l in enumerate(tail):
        cur, cur_h = conv_h(cur, l["w"], l["b"], n_cols=n_cols, h=cur_h,
                            stride=l["stride"], pad=l["pad"], neg_slope=l["act"], gen=gen)
        if li < len(tail) - 1:                                       # remaining quaternion convs
            fmap.append(to_nchw(cur[:, :l["c_out"]].astype(jnp.float32), cur_h, l["c_out"]))

    y = cur[:, :1].astype(jnp.float32)                               # conv_post real channel
    fmap.append(to_nchw(y, cur_h, 1))
    out = jnp.transpose(y.reshape(cur_h, b, period), (1, 0, 2)).reshape(b, cur_h * period)
    return out, fmap


def qdiscriminator_p_ref(x, layers, period):
    """Pure-JAX reference (XLA convs) mirroring the PyTorch forward with the same
    bf16-input / f32-accumulate precision policy as the Pallas path."""
    b, c, t = x.shape
    if t % period != 0:
        n_pad = period - t % period
        x = jnp.pad(x, ((0, 0), (0, 0), (0, n_pad)), mode="reflect")
        t = t + n_pad
    x = x.reshape(b, c, t // period, period)

    def conv(x, l):
        xq = x.astype(jnp.bfloat16).astype(jnp.float32)
        w = l["w"].astype(jnp.bfloat16).astype(jnp.float32)[..., None]   # (O, I, KH, 1)
        y = lax.conv_general_dilated(xq, w, window_strides=(l["stride"], 1),
                                     padding=((l["pad"], l["pad"]), (0, 0)),
                                     dimension_numbers=("NCHW", "OIHW", "NCHW"))
        y = y + l["b"][None, :, None, None]
        if l["act"] is not None:
            y = jnp.where(y >= 0.0, y, y * l["act"])
        return y

    fmap = []
    x = conv(x, layers[0])
    for l in layers[1:6]:
        x = conv(x, l)
        fmap.append(x)
    x = conv(x, layers[6])
    fmap.append(x)
    return x.reshape(b, -1), fmap


if __name__ == "__main__":
    key = jax.random.PRNGKey(0)
    kp, kx = jax.random.split(key)

    period = 3
    b, c, t = 2, 1, 22                 # t % period != 0 -> exercises the reflect-pad path
    layers = make_params(kp)
    prepped = prepare_pallas_params(layers)   # weight transpose/pad/cast hoisted out of forward
    x = jax.random.normal(kx, (b, c, t), jnp.float32)

    out, fmap = qdiscriminator_p_pallas(x, prepped, period)
    out = jax.block_until_ready(out)

    ref_out, ref_fmap = qdiscriminator_p_ref(x, layers, period)
    assert out.shape == ref_out.shape, (out.shape, ref_out.shape)
    assert len(fmap) == len(ref_fmap) == 6
    for a, r in zip(fmap, ref_fmap):
        assert a.shape == r.shape, (a.shape, r.shape)
        assert jnp.allclose(a, r, rtol=2e-2, atol=2e-2), float(jnp.max(jnp.abs(a - r)))
    assert jnp.allclose(out, ref_out, rtol=2e-2, atol=2e-2), float(jnp.max(jnp.abs(out - ref_out)))

    print("KERNEL_OK")
</pallas_src>

<mosaic_0001>
module attributes {stable_mosaic.version = 11 : i64} {
  func.func @_fused_head_kernel(%arg0: i32, %arg1: memref<90x1xbf16, #tpu.memory_space<vmem>>, %arg2: memref<3x1x8xbf16, #tpu.memory_space<vmem>>, %arg3: memref<1x8xf32, #tpu.memory_space<vmem>>, %arg4: memref<5x8x32xbf16, #tpu.memory_space<vmem>>, %arg5: memref<1x32xf32, #tpu.memory_space<vmem>>, %arg6: memref<18x32xbf16, #tpu.memory_space<vmem>>, %arg7: memref<72x8xbf16, #tpu.memory_space<vmem>>) attributes {dimension_semantics = [#tpu.dimension_semantics<arbitrary>], iteration_bounds = array<i64: 1>, scalar_prefetch = 0 : i64, scratch_operands = 1 : i64, tpu.core_type = #tpu.core_type<tc>, window_params = [{pipeline_mode = #tpu.pipeline_mode<synchronous>, transform_indices = @transform_0, window_bounds = array<i64: 90, 1>}, {pipeline_mode = #tpu.pipeline_mode<synchronous>, transform_indices = @transform_1, window_bounds = array<i64: 3, 1, 8>}, {pipeline_mode = #tpu.pipeline_mode<synchronous>, transform_indices = @transform_2, window_bounds = array<i64: 1, 8>}, {pipeline_mode = #tpu.pipeline_mode<synchronous>, transform_indices = @transform_3, window_bounds = array<i64: 5, 8, 32>}, {pipeline_mode = #tpu.pipeline_mode<synchronous>, transform_indices = @transform_4, window_bounds = array<i64: 1, 32>}, {pipeline_mode = #tpu.pipeline_mode<synchronous>, transform_indices = @transform_5, window_bounds = array<i64: 18, 32>}]} {
    %0 = tpu.iota {dimensions = array<i32: 0>} : vector<24x1xi32>
    %cst = arith.constant 0.000000e+00 : f32
    %1 = vector.broadcast %cst : f32 to vector<24x8xf32>
    %c0 = arith.constant 0 : index
    %c0_0 = arith.constant 0 : index
    %2 = vector.load %arg1[%c0, %c0_0] : memref<90x1xbf16, #tpu.memory_space<vmem>>, vector<24x1xbf16>
    %3 = arith.extf %2 : vector<24x1xbf16> to vector<24x1xf32>
    %c0_1 = arith.constant 0 : index
    %c0_2 = arith.constant 0 : index
    %c0_3 = arith.constant 0 : index
    %4 = vector.load %arg2[%c0_1, %c0_2, %c0_3] : memref<3x1x8xbf16, #tpu.memory_space<vmem>>, vector<1x1x8xbf16>
    %5 = vector.shape_cast %4 : vector<1x1x8xbf16> to vector<1x8xbf16>
    %6 = arith.extf %5 : vector<1x8xbf16> to vector<1x8xf32>
    %7 = vector.broadcast %3 : vector<24x1xf32> to vector<24x8xf32>
    %8 = vector.broadcast %6 : vector<1x8xf32> to vector<24x8xf32>
    %9 = arith.mulf %7, %8 : vector<24x8xf32>
    %10 = arith.addf %1, %9 : vector<24x8xf32>
    %c30 = arith.constant 30 : index
    %c0_4 = arith.constant 0 : index
    %11 = vector.load %arg1[%c30, %c0_4] : memref<90x1xbf16, #tpu.memory_space<vmem>>, vector<24x1xbf16>
    %12 = arith.extf %11 : vector<24x1xbf16> to vector<24x1xf32>
    %c1 = arith.constant 1 : index
    %c0_5 = arith.constant 0 : index
    %c0_6 = arith.constant 0 : index
    %13 = vector.load %arg2[%c1, %c0_5, %c0_6] : memref<3x1x8xbf16, #tpu.memory_space<vmem>>, vector<1x1x8xbf16>
    %14 = vector.shape_cast %13 : vector<1x1x8xbf16> to vector<1x8xbf16>
    %15 = arith.extf %14 : vector<1x8xbf16> to vector<1x8xf32>
    %16 = vector.broadcast %12 : vector<24x1xf32> to vector<24x8xf32>
    %17 = vector.broadcast %15 : vector<1x8xf32> to vector<24x8xf32>
    %18 = arith.mulf %16, %17 : vector<24x8xf32>
    %19 = arith.addf %10, %18 : vector<24x8xf32>
    %c60 = arith.constant 60 : index
    %c0_7 = arith.constant 0 : index
    %20 = vector.load %arg1[%c60, %c0_7] : memref<90x1xbf16, #tpu.memory_space<vmem>>, vector<24x1xbf16>
    %21 = arith.extf %20 : vector<24x1xbf16> to vector<24x1xf32>
    %c2 = arith.constant 2 : index
    %c0_8 = arith.constant 0 : index
    %c0_9 = arith.constant 0 : index
    %22 = vector.load %arg2[%c2, %c0_8, %c0_9] : memref<3x1x8xbf16, #tpu.memory_space<vmem>>, vector<1x1x8xbf16>
    %23 = vector.shape_cast %22 : vector<1x1x8xbf16> to vector<1x8xbf16>
    %24 = arith.extf %23 : vector<1x8xbf16> to vector<1x8xf32>
    %25 = vector.broadcast %21 : vector<24x1xf32> to vector<24x8xf32>
    %26 = vector.broadcast %24 : vector<1x8xf32> to vector<24x8xf32>
    %27 = arith.mulf %25, %26 : vector<24x8xf32>
    %28 = arith.addf %19, %27 : vector<24x8xf32>
    %c0_10 = arith.constant 0 : index
    %c0_11 = arith.constant 0 : index
    %29 = vector.load %arg3[%c0_10, %c0_11] : memref<1x8xf32, #tpu.memory_space<vmem>>, vector<1x8xf32>
    %30 = vector.broadcast %29 : vector<1x8xf32> to vector<24x8xf32>
    %31 = arith.addf %28, %30 : vector<24x8xf32>
    %c6_i32 = arith.constant 6 : i32
    %32 = vector.broadcast %c6_i32 : i32 to vector<24x1xi32>
    %33 = arith.cmpi sge, %0, %32 : vector<24x1xi32>
    %c24_i32 = arith.constant 24 : i32
    %34 = vector.broadcast %c24_i32 : i32 to vector<24x1xi32>
    %35 = arith.cmpi slt, %0, %34 : vector<24x1xi32>
    %36 = arith.andi %33, %35 : vector<24x1xi1>
    %cst_12 = arith.constant 0.000000e+00 : f32
    %37 = vector.shape_cast %36 : vector<24x1xi1> to vector<24x1xi1>
    %38 = vector.broadcast %37 : vector<24x1xi1> to vector<24x8xi1>
    %39 = vector.broadcast %cst_12 : f32 to vector<24x8xf32>
    %40 = arith.select %38, %31, %39 : vector<24x8xi1>, vector<24x8xf32>
    %41 = arith.truncf %40 : vector<24x8xf32> to vector<24x8xbf16>
    %c0_13 = arith.constant 0 : index
    %c0_14 = arith.constant 0 : index
    %42 = vector.load %arg7[%c0_13, %c0_14] : memref<72x8xbf16, #tpu.memory_space<vmem>>, vector<24x8xbf16>
    tpu.vector_store %arg7[%c0_13, %c0_14], %41 {strides = array<i32>} : memref<72x8xbf16, #tpu.memory_space<vmem>>, vector<24x8xbf16>,
    %cst_15 = arith.constant 0.000000e+00 : f32
    %43 = vector.broadcast %cst_15 : f32 to vector<24x8xf32>
    %c30_16 = arith.constant 30 : index
    %c0_17 = arith.constant 0 : index
    %44 = vector.load %arg1[%c30_16, %c0_17] : memref<90x1xbf16, #tpu.memory_space<vmem>>, vector<24x1xbf16>
    %45 = arith.extf %44 : vector<24x1xbf16> to vector<24x1xf32>
    %c0_18 = arith.constant 0 : index
    %c0_19 = arith.constant 0 : index
    %c0_20 = arith.constant 0 : index
    %46 = vector.load %arg2[%c0_18, %c0_19, %c0_20] : memref<3x1x8xbf16, #tpu.memory_space<vmem>>, vector<1x1x8xbf16>
    %47 = vector.shape_cast %46 : vector<1x1x8xbf16> to vector<1x8xbf16>
    %48 = arith.extf %47 : vector<1x8xbf16> to vector<1x8xf32>
    %49 = vector.broadcast %45 : vector<24x1xf32> to vector<24x8xf32>
    %50 = vector.broadcast %48 : vector<1x8xf32> to vector<24x8xf32>
    %51 = arith.mulf %49, %50 : vector<24x8xf32>
    %52 = arith.addf %43, %51 : vector<24x8xf32>
    %c60_21 = arith.constant 60 : index
    %c0_22 = arith.constant 0 : index
    %53 = vector.load %arg1[%c60_21, %c0_22] : memref<90x1xbf16, #tpu.memory_space<vmem>>, vector<24x1xbf16>
    %54 = arith.extf %53 : vector<24x1xbf16> to vector<24x1xf32>
    %c1_23 = arith.constant 1 : index
    %c0_24 = arith.constant 0 : index
    %c0_25 = arith.constant 0 : index
    %55 = vector.load %arg2[%c1_23, %c0_24, %c0_25] : memref<3x1x8xbf16, #tpu.memory_space<vmem>>, vector<1x1x8xbf16>
    %56 = vector.shape_cast %55 : vector<1x1x8xbf16> to vector<1x8xbf16>
    %57 = arith.extf %56 : vector<1x8xbf16> to vector<1x8xf32>
    %58 = vector.broadcast %54 : vector<24x1xf32> to vector<24x8xf32>
    %59 = vector.broadcast %57 : vector<1x8xf32> to vector<24x8xf32>
    %60 = arith.mulf %58, %59 : vector<24x8xf32>
    %61 = arith.addf %52, %60 : vector<24x8xf32>
    %c6 = arith.constant 6 : index
    %c0_26 = arith.constant 0 : index
    %62 = vector.load %arg1[%c6, %c0_26] : memref<90x1xbf16, #tpu.memory_space<vmem>>, vector<24x1xbf16>
    %63 = arith.extf %62 : vector<24x1xbf16> to vector<24x1xf32>
    %c2_27 = arith.constant 2 : index
    %c0_28 = arith.constant 0 : index
    %c0_29 = arith.constant 0 : index
    %64 = vector.load %arg2[%c2_27, %c0_28, %c0_29] : memref<3x1x8xbf16, #tpu.memory_space<vmem>>, vector<1x1x8xbf16>
    %65 = vector.shape_cast %64 : vector<1x1x8xbf16> to vector<1x8xbf16>
    %66 = arith.extf %65 : vector<1x8xbf16> to vector<1x8xf32>
    %67 = vector.broadcast %63 : vector<24x1xf32> to vector<24x8xf32>
    %68 = vector.broadcast %66 : vector<1x8xf32> to vector<24x8xf32>
    %69 = arith.mulf %67, %68 : vector<24x8xf32>
    %70 = arith.addf %61, %69 : vector<24x8xf32>
    %c0_30 = arith.constant 0 : index
    %c0_31 = arith.constant 0 : index
    %71 = vector.load %arg3[%c0_30, %c0_31] : memref<1x8xf32, #tpu.memory_space<vmem>>, vector<1x8xf32>
    %72 = vector.broadcast %71 : vector<1x8xf32> to vector<24x8xf32>
    %73 = arith.addf %70, %72 : vector<24x8xf32>
    %c6_i32_32 = arith.constant 6 : i32
    %74 = vector.broadcast %c6_i32_32 : i32 to vector<24x1xi32>
    %75 = arith.cmpi sge, %0, %74 : vector<24x1xi32>
    %c18_i32 = arith.constant 18 : i32
    %76 = vector.broadcast %c18_i32 : i32 to vector<24x1xi32>
    %77 = arith.cmpi slt, %0, %76 : vector<24x1xi32>
    %78 = arith.andi %75, %77 : vector<24x1xi1>
    %cst_33 = arith.constant 0.000000e+00 : f32
    %79 = vector.shape_cast %78 : vector<24x1xi1> to vector<24x1xi1>
    %80 = vector.broadcast %79 : vector<24x1xi1> to vector<24x8xi1>
    %81 = vector.broadcast %cst_33 : f32 to vector<24x8xf32>
    %82 = arith.select %80, %73, %81 : vector<24x8xi1>, vector<24x8xf32>
    %83 = arith.truncf %82 : vector<24x8xf32> to vector<24x8xbf16>
    %c24 = arith.constant 24 : index
    %c0_34 = arith.constant 0 : index
    %84 = vector.load %arg7[%c24, %c0_34] : memref<72x8xbf16, #tpu.memory_space<vmem>>, vector<24x8xbf16>
    tpu.vector_store %arg7[%c24, %c0_34], %83 {strides = array<i32>} : memref<72x8xbf16, #tpu.memory_space<vmem>>, vector<24x8xbf16>,
    %cst_35 = arith.constant 0.000000e+00 : f32
    %85 = vector.broadcast %cst_35 : f32 to vector<24x8xf32>
    %c60_36 = arith.constant 60 : index
    %c0_37 = arith.constant 0 : index
    %86 = vector.load %arg1[%c60_36, %c0_37] : memref<90x1xbf16, #tpu.memory_space<vmem>>, vector<24x1xbf16>
    %87 = arith.extf %86 : vector<24x1xbf16> to vector<24x1xf32>
    %c0_38 = arith.constant 0 : index
    %c0_39 = arith.constant 0 : index
    %c0_40 = arith.constant 0 : index
    %88 = vector.load %arg2[%c0_38, %c0_39, %c0_40] : memref<3x1x8xbf16, #tpu.memory_space<vmem>>, vector<1x1x8xbf16>
    %89 = vector.shape_cast %88 : vector<1x1x8xbf16> to vector<1x8xbf16>
    %90 = arith.extf %89 : vector<1x8xbf16> to vector<1x8xf32>
    %91 = vector.broadcast %87 : vector<24x1xf32> to vector<24x8xf32>
    %92 = vector.broadcast %90 : vector<1x8xf32> to vector<24x8xf32>
    %93 = arith.mulf %91, %92 : vector<24x8xf32>
    %94 = arith.addf %85, %93 : vector<24x8xf32>
    %c6_41 = arith.constant 6 : index
    %c0_42 = arith.constant 0 : index
    %95 = vector.load %arg1[%c6_41, %c0_42] : memref<90x1xbf16, #tpu.memory_space<vmem>>, vector<24x1xbf16>
    %96 = arith.extf %95 : vector<24x1xbf16> to vector<24x1xf32>
    %c1_43 = arith.constant 1 : index
    %c0_44 = arith.constant 0 : index
    %c0_45 = arith.constant 0 : index
    %97 = vector.load %arg2[%c1_43, %c0_44, %c0_45] : memref<3x1x8xbf16, #tpu.memory_space<vmem>>, vector<1x1x8xbf16>
    %98 = vector.shape_cast %97 : vector<1x1x8xbf16> to vector<1x8xbf16>
    %99 = arith.extf %98 : vector<1x8xbf16> to vector<1x8xf32>
    %100 = vector.broadcast %96 : vector<24x1xf32> to vector<24x8xf32>
    %101 = vector.broadcast %99 : vector<1x8xf32> to vector<24x8xf32>
    %102 = arith.mulf %100, %101 : vector<24x8xf32>
    %103 = arith.addf %94, %102 : vector<24x8xf32>
    %c36 = arith.constant 36 : index
    %c0_46 = arith.constant 0 : index
    %104 = vector.load %arg1[%c36, %c0_46] : memref<90x1xbf16, #tpu.memory_space<vmem>>, vector<24x1xbf16>
    %105 = arith.extf %104 : vector<24x1xbf16> to vector<24x1xf32>
    %c2_47 = arith.constant 2 : index
    %c0_48 = arith.constant 0 : index
    %c0_49 = arith.constant 0 : index
    %106 = vector.load %arg2[%c2_47, %c0_48, %c0_49] : memref<3x1x8xbf16, #tpu.memory_space<vmem>>, vector<1x1x8xbf16>
    %107 = vector.shape_cast %106 : vector<1x1x8xbf16> to vector<1x8xbf16>
    %108 = arith.extf %107 : vector<1x8xbf16> to vector<1x8xf32>
    %109 = vector.broadcast %105 : vector<24x1xf32> to vector<24x8xf32>
    %110 = vector.broadcast %108 : vector<1x8xf32> to vector<24x8xf32>
    %111 = arith.mulf %109, %110 : vector<24x8xf32>
    %112 = arith.addf %103, %111 : vector<24x8xf32>
    %c0_50 = arith.constant 0 : index
    %c0_51 = arith.constant 0 : index
    %113 = vector.load %arg3[%c0_50, %c0_51] : memref<1x8xf32, #tpu.memory_space<vmem>>, vector<1x8xf32>
    %114 = vector.broadcast %113 : vector<1x8xf32> to vector<24x8xf32>
    %115 = arith.addf %112, %114 : vector<24x8xf32>
    %c0_i32 = arith.constant 0 : i32
    %116 = vector.broadcast %c0_i32 : i32 to vector<24x1xi32>
    %117 = arith.cmpi sge, %0, %116 : vector<24x1xi32>
    %c18_i32_52 = arith.constant 18 : i32
    %118 = vector.broadcast %c18_i32_52 : i32 to vector<24x1xi32>
    %119 = arith.cmpi slt, %0, %118 : vector<24x1xi32>
    %120 = arith.andi %117, %119 : vector<24x1xi1>
    %cst_53 = arith.constant 0.000000e+00 : f32
    %121 = vector.shape_cast %120 : vector<24x1xi1> to vector<24x1xi1>
    %122 = vector.broadcast %121 : vector<24x1xi1> to vector<24x8xi1>
    %123 = vector.broadcast %cst_53 : f32 to vector<24x8xf32>
    %124 = arith.select %122, %115, %123 : vector<24x8xi1>, vector<24x8xf32>
    %125 = arith.truncf %124 : vector<24x8xf32> to vector<24x8xbf16>
    %c48 = arith.constant 48 : index
    %c0_54 = arith.constant 0 : index
    %126 = vector.load %arg7[%c48, %c0_54] : memref<72x8xbf16, #tpu.memory_space<vmem>>, vector<24x8xbf16>
    tpu.vector_store %arg7[%c48, %c0_54], %125 {strides = array<i32>} : memref<72x8xbf16, #tpu.memory_space<vmem>>, vector<24x8xbf16>,
    %cst_55 = arith.constant 0.000000e+00 : f32
    %127 = vector.broadcast %cst_55 : f32 to vector<18x32xf32>
    %c0_56 = arith.constant 0 : index
    %c0_57 = arith.constant 0 : index
    %128 = vector.load %arg7[%c0_56, %c0_57] : memref<72x8xbf16, #tpu.memory_space<vmem>>, vector<18x8xbf16>
    %c0_58 = arith.constant 0 : index
    %c0_59 = arith.constant 0 : index
    %c0_60 = arith.constant 0 : index
    %129 = vector.load %arg4[%c0_58, %c0_59, %c0_60] : memref<5x8x32xbf16, #tpu.memory_space<vmem>>, vector<1x8x32xbf16>
    %130 = vector.shape_cast %129 : vector<1x8x32xbf16> to vector<8x32xbf16>
    %cst_61 = arith.constant dense<0.000000e+00> : vector<18x32xf32>
    %131 = tpu.matmul %128, %130, %cst_61 {dimension_numbers = #tpu.dot_dimension_numbers<[1], [0], [0], [1], [0, 0, 1, 1], [], []>} : vector<18x8xbf16>, vector<8x32xbf16>, vector<18x32xf32> -> vector<18x32xf32>
    %132 = arith.addf %127, %131 : vector<18x32xf32>
    %c24_62 = arith.constant 24 : index
    %c0_63 = arith.constant 0 : index
    %133 = vector.load %arg7[%c24_62, %c0_63] : memref<72x8xbf16, #tpu.memory_space<vmem>>, vector<18x8xbf16>
    %c1_64 = arith.constant 1 : index
    %c0_65 = arith.constant 0 : index
    %c0_66 = arith.constant 0 : index
    %134 = vector.load %arg4[%c1_64, %c0_65, %c0_66] : memref<5x8x32xbf16, #tpu.memory_space<vmem>>, vector<1x8x32xbf16>
    %135 = vector.shape_cast %134 : vector<1x8x32xbf16> to vector<8x32xbf16>
    %cst_67 = arith.constant dense<0.000000e+00> : vector<18x32xf32>
    %136 = tpu.matmul %133, %135, %cst_67 {dimension_numbers = #tpu.dot_dimension_numbers<[1], [0], [0], [1], [0, 0, 1, 1], [], []>} : vector<18x8xbf16>, vector<8x32xbf16>, vector<18x32xf32> -> vector<18x32xf32>
    %137 = arith.addf %132, %136 : vector<18x32xf32>
    %c48_68 = arith.constant 48 : index
    %c0_69 = arith.constant 0 : index
    %138 = vector.load %arg7[%c48_68, %c0_69] : memref<72x8xbf16, #tpu.memory_space<vmem>>, vector<18x8xbf16>
    %c2_70 = arith.constant 2 : index
    %c0_71 = arith.constant 0 : index
    %c0_72 = arith.constant 0 : index
    %139 = vector.load %arg4[%c2_70, %c0_71, %c0_72] : memref<5x8x32xbf16, #tpu.memory_space<vmem>>, vector<1x8x32xbf16>
    %140 = vector.shape_cast %139 : vector<1x8x32xbf16> to vector<8x32xbf16>
    %cst_73 = arith.constant dense<0.000000e+00> : vector<18x32xf32>
    %141 = tpu.matmul %138, %140, %cst_73 {dimension_numbers = #tpu.dot_dimension_numbers<[1], [0], [0], [1], [0, 0, 1, 1], [], []>} : vector<18x8xbf16>, vector<8x32xbf16>, vector<18x32xf32> -> vector<18x32xf32>
    %142 = arith.addf %137, %141 : vector<18x32xf32>
    %c6_74 = arith.constant 6 : index
    %c0_75 = arith.constant 0 : index
    %143 = vector.load %arg7[%c6_74, %c0_75] : memref<72x8xbf16, #tpu.memory_space<vmem>>, vector<18x8xbf16>
    %c3 = arith.constant 3 : index
    %c0_76 = arith.constant 0 : index
    %c0_77 = arith.constant 0 : index
    %144 = vector.load %arg4[%c3, %c0_76, %c0_77] : memref<5x8x32xbf16, #tpu.memory_space<vmem>>, vector<1x8x32xbf16>
    %145 = vector.shape_cast %144 : vector<1x8x32xbf16> to vector<8x32xbf16>
    %cst_78 = arith.constant dense<0.000000e+00> : vector<18x32xf32>
    %146 = tpu.matmul %143, %145, %cst_78 {dimension_numbers = #tpu.dot_dimension_numbers<[1], [0], [0], [1], [0, 0, 1, 1], [], []>} : vector<18x8xbf16>, vector<8x32xbf16>, vector<18x32xf32> -> vector<18x32xf32>
    %147 = arith.addf %142, %146 : vector<18x32xf32>
    %c30_79 = arith.constant 30 : index
    %c0_80 = arith.constant 0 : index
    %148 = vector.load %arg7[%c30_79, %c0_80] : memref<72x8xbf16, #tpu.memory_space<vmem>>, vector<18x8xbf16>
    %c4 = arith.constant 4 : index
    %c0_81 = arith.constant 0 : index
    %c0_82 = arith.constant 0 : index
    %149 = vector.load %arg4[%c4, %c0_81, %c0_82] : memref<5x8x32xbf16, #tpu.memory_space<vmem>>, vector<1x8x32xbf16>
    %150 = vector.shape_cast %149 : vector<1x8x32xbf16> to vector<8x32xbf16>
    %cst_83 = arith.constant dense<0.000000e+00> : vector<18x32xf32>
    %151 = tpu.matmul %148, %150, %cst_83 {dimension_numbers = #tpu.dot_dimension_numbers<[1], [0], [0], [1], [0, 0, 1, 1], [], []>} : vector<18x8xbf16>, vector<8x32xbf16>, vector<18x32xf32> -> vector<18x32xf32>
    %152 = arith.addf %147, %151 : vector<18x32xf32>
    %c0_84 = arith.constant 0 : index
    %c0_85 = arith.constant 0 : index
    %153 = vector.load %arg5[%c0_84, %c0_85] : memref<1x32xf32, #tpu.memory_space<vmem>>, vector<1x32xf32>
    %154 = vector.broadcast %153 : vector<1x32xf32> to vector<18x32xf32>
    %155 = arith.addf %152, %154 : vector<18x32xf32>
    %cst_86 = arith.constant 0.000000e+00 : f32
    %156 = vector.broadcast %cst_86 : f32 to vector<18x32xf32>
    %157 = arith.cmpf oge, %155, %156 : vector<18x32xf32>
    %cst_87 = arith.constant 1.000000e-01 : f32
    %158 = vector.broadcast %cst_87 : f32 to vector<18x32xf32>
    %159 = arith.mulf %155, %158 : vector<18x32xf32>
    %160 = arith.select %157, %155, %159 : vector<18x32xi1>, vector<18x32xf32>
    %161 = arith.truncf %160 : vector<18x32xf32> to vector<18x32xbf16>
    %c0_88 = arith.constant 0 : index
    %c0_89 = arith.constant 0 : index
    %162 = vector.load %arg6[%c0_88, %c0_89] : memref<18x32xbf16, #tpu.memory_space<vmem>>, vector<18x32xbf16>
    tpu.vector_store %arg6[%c0_88, %c0_89], %161 {strides = array<i32>} : memref<18x32xbf16, #tpu.memory_space<vmem>>, vector<18x32xbf16>,
    return
  }
  func.func @transform_0(%arg0: i32) -> (i32, i32) {
    %c0_i32 = arith.constant 0 : i32
    %c0_i32_0 = arith.constant 0 : i32
    %c0_i32_1 = arith.constant 0 : i32
    return %c0_i32, %c0_i32_0 : i32, i32
  }
  func.func @transform_1(%arg0: i32) -> (i32, i32, i32) {
    %c0_i32 = arith.constant 0 : i32
    %c0_i32_0 = arith.constant 0 : i32
    %c0_i32_1 = arith.constant 0 : i32
    %c0_i32_2 = arith.constant 0 : i32
    return %c0_i32, %c0_i32_0, %c0_i32_1 : i32, i32, i32
  }
  func.func @transform_2(%arg0: i32) -> (i32, i32) {
    %c0_i32 = arith.constant 0 : i32
    %c0_i32_0 = arith.constant 0 : i32
    %c0_i32_1 = arith.constant 0 : i32
    return %c0_i32, %c0_i32_0 : i32, i32
  }
  func.func @transform_3(%arg0: i32) -> (i32, i32, i32) {
    %c0_i32 = arith.constant 0 : i32
    %c0_i32_0 = arith.constant 0 : i32
    %c0_i32_1 = arith.constant 0 : i32
    %c0_i32_2 = arith.constant 0 : i32
    return %c0_i32, %c0_i32_0, %c0_i32_1 : i32, i32, i32
  }
  func.func @transform_4(%arg0: i32) -> (i32, i32) {
    %c0_i32 = arith.constant 0 : i32
    %c0_i32_0 = arith.constant 0 : i32
    %c0_i32_1 = arith.constant 0 : i32
    return %c0_i32, %c0_i32_0 : i32, i32
  }
  func.func @transform_5(%arg0: i32) -> (i32, i32) {
    %c0_i32 = arith.constant 0 : i32
    %c0_i32_0 = arith.constant 0 : i32
    %c0_i32_1 = arith.constant 0 : i32
    return %c0_i32, %c0_i32_0 : i32, i32
  }
}

</mosaic_0001>

<llo_original>
// kernel: tpu_custom_call.1
$region0: #{tpu_custom_call.1}
  #allocation0 [shape = 'u32[]', space=smem, size = 0x4, offset = 0x4, fixed_abs, tag = 'smem constant byte address 0x4 - core index']
  #allocation1 [shape = 'u32[144,128]{1,0:T(1,128)}', space=vmem, size = 0x12000, scoped, tag = 'internal scratch']
  #allocation2 [shape = 'bf16[72,8]{1,0:T(8,128)(2,1)}', space=vmem, size = 0x4800, scoped, tag = 'scratch operand']
  %s0 = inlined_call_operand.vmem [shape: bf16[90,1], index: 0, kind: input, shape index: {}]
  %s1 = inlined_call_operand.vmem [shape: bf16[3,1,8], index: 1, kind: input, shape index: {}]
  %s2 = inlined_call_operand.vmem [shape: f32[1,8], index: 2, kind: input, shape index: {}]
  %s3 = inlined_call_operand.vmem [shape: bf16[5,8,32], index: 3, kind: input, shape index: {}]
  %s4 = inlined_call_operand.vmem [shape: f32[1,32], index: 4, kind: input, shape index: {}]
  %s5 = inlined_call_operand.hbm [shape: bf16[18,32], index: 5, kind: output, shape index: {}]
  %s6 = sld [smem:[#allocation0]]
  $region30: #{tpu_custom_call.1} parent=0
    _
  %s8 = ssub.s32 1, %s6
  %s9 = scalar_select 0, %s8, %s6
  $region1: #{tpu_custom_call.1} parent=0
    #allocation3 [shape = 'u8[6144]{0}', space=vmem, size = 0x1800, scoped, tag = 'output window, operand 0, single buffered']
    #allocation4 [shape = 's32[1]{0}', space=sflag, size = 0x4, scoped, tag = 'scoped memory for tpu_custom_call.1']
    %10 = vsyncpa [#allocation4], 0
    // Predicated region
    $region2: #{tpu_custom_call.1} parent=1 // pred_check
      _
    $region3: #{tpu_custom_call.1} parent=1 // pred_check_branch
      %12 = sbr.rel (0) target = $region5
    $region4: #{tpu_custom_call.1} parent=1 // pred_region
      _
    $region5: #{tpu_custom_call.1} parent=1 // pred_fallthru
      _
    // Predicated region
    $region6: #{tpu_custom_call.1} parent=1 // pred_check
      _
    $region7: #{tpu_custom_call.1} parent=1 // pred_check_branch
      %14 = sbr.rel (0) target = $region9
    $region8: #{tpu_custom_call.1} parent=1 // pred_region
      _
    $region9: #{tpu_custom_call.1} parent=1 // pred_fallthru
      _
    // Predicated region
    $region10: #{tpu_custom_call.1} parent=1 // pred_check
      _
    $region11: #{tpu_custom_call.1} parent=1 // pred_check_branch
      %16 = sbr.rel (0) target = $region13
    $region12: #{tpu_custom_call.1} parent=1 // pred_region
      _
    $region13: #{tpu_custom_call.1} parent=1 // pred_fallthru
      _
    // Predicated region
    $region14: #{tpu_custom_call.1} parent=1 // pred_check
      _
    $region15: #{tpu_custom_call.1} parent=1 // pred_check_branch
      %18 = sbr.rel (0) target = $region17
    $region16: #{tpu_custom_call.1} parent=1 // pred_region
      _
    $region17: #{tpu_custom_call.1} parent=1 // pred_fallthru
      _
    // Predicated region
    $region18: #{tpu_custom_call.1} parent=1 // pred_check
      _
    $region19: #{tpu_custom_call.1} parent=1 // pred_check_branch
      %20 = sbr.rel (0) target = $region21
    $region20: #{tpu_custom_call.1} parent=1 // pred_region
      _
    $region21: #{tpu_custom_call.1} parent=1 // pred_fallthru
      _
    %v22 = vlaneseq
    %v23 = vshrl.u32 %v22, 7
    %v24 = vadd.s32 %v23, 8
    %v25 = vadd.s32 %v23, 16
    %v26 = vld [vmem:[%s0] sm:$0xf]
    %v27 = vld [vmem:[%s0 + $0x4] sm:$0xf]
    %v28 = vld [vmem:[%s0 + $0x8] sm:$0xf]
    %v29 = vunpack.c.l.bf16 %v26
    %v30 = vunpack.c.l.bf16 %v27
    %v31 = vunpack.c.l.bf16 %v28
    %v32 = vld [vmem:[%s1] sm:$0x1]
    %v33 = vunpack.c.l.bf16 %v32
    %35 = vset.pattern.permute.xlu0 0
    %36 = vperm.xlu0 %35, %v29
    %v37 = vpop.permute.xlu0 %36
    %40 = vset.pattern.permute.xlu0 0
    %41 = vperm.xlu0 %40, %v30
    %v42 = vpop.permute.xlu0 %41
    %45 = vset.pattern.permute.xlu0 0
    %46 = vperm.xlu0 %45, %v31
    %v47 = vpop.permute.xlu0 %46
    %v49 = vlaneseq
    %v50 = vshrl.u32 %v49, 7
    %v51 = vsub.s32 0, %v50
    %v52 = vrot.slane %v33, %v51
    %v53 = vmul.f32 %v37, %v52
    %v54 = vmul.f32 %v42, %v52
    %v55 = vmul.f32 %v47, %v52
    %v56 = vadd.f32 %v53, 0.0
    %v57 = vadd.f32 %v54, 0.0
    %v58 = vadd.f32 %v55, 0.0
    %v59 = vld [vmem:[%s0 + $0xc] sm:$0x8]
    %v60 = vld [vmem:[%s0 + $0x10] sm:$0xf]
    %v61 = vld [vmem:[%s0 + $0x14] sm:$0xf]
    %v62 = vld [vmem:[%s0 + $0x18] sm:$0x7]
    %v63 = vunpack.c.l.bf16 %v59
    %v64 = vunpack.c.l.bf16 %v60
    %v65 = vunpack.c.l.bf16 %v61
    %v66 = vunpack.c.l.bf16 %v62
    %s67 = scalar_lea.vmem %s1, 1
    %v68 = vld [vmem:[%s67] sm:$0x1]
    %v69 = vunpack.c.l.bf16 %v68
    %71 = vset.pattern.permute.xlu0 0
    %72 = vperm.xlu0 %71, %v63
    %v73 = vpop.permute.xlu0 %72
    %76 = vset.pattern.permute.xlu0 0
    %77 = vperm.xlu0 %76, %v64
    %v78 = vpop.permute.xlu0 %77
    %81 = vset.pattern.permute.xlu0 0
    %82 = vperm.xlu0 %81, %v65
    %v83 = vpop.permute.xlu0 %82
    %86 = vset.pattern.permute.xlu0 0
    %87 = vperm.xlu0 %86, %v66
    %v88 = vpop.permute.xlu0 %87
    %v90 = vlaneseq
    %v91 = vshrl.u32 %v90, 7
    %v92 = vsub.s32 0, %v91
    %v93 = vrot.slane %v69, %v92
    %v94 = vmul.f32 %v73, %v93
    %v95 = vmul.f32 %v78, %v93
    %v96 = vmul.f32 %v83, %v93
    %v97 = vmul.f32 %v88, %v93
    %vm102 = vcmask 1041408
    %v103 = vrot.slane %v94, 6
    %v104 = vrot.slane %v95, 6
    %v105 = vsel %vm102, %v103, %v104
    %v106 = vrot.slane %v96, 6
    %v107 = vsel %vm102, %v104, %v106
    %v108 = vrot.slane %v97, 6
    %v109 = vsel %vm102, %v106, %v108
    %v113 = vadd.f32 %v56, %v105
    %v114 = vadd.f32 %v57, %v107
    %v115 = vadd.f32 %v58, %v109
    %v116 = vld [vmem:[%s0 + $0x1c] sm:$0xc]
    %v117 = vld [vmem:[%s0 + $0x20] sm:$0xf]
    %v118 = vld [vmem:[%s0 + $0x24] sm:$0xf]
    %v119 = vld [vmem:[%s0 + $0x28] sm:$0x3]
    %v120 = vunpack.c.l.bf16 %v116
    %v121 = vunpack.c.l.bf16 %v117
    %v122 = vunpack.c.l.bf16 %v118
    %v123 = vunpack.c.l.bf16 %v119
    %s124 = scalar_lea.vmem %s1, 2
    %v125 = vld [vmem:[%s124] sm:$0x1]
    %v126 = vunpack.c.l.bf16 %v125
    %128 = vset.pattern.permute.xlu0 0
    %129 = vperm.xlu0 %128, %v120
    %v130 = vpop.permute.xlu0 %129
    %133 = vset.pattern.permute.xlu0 0
    %134 = vperm.xlu0 %133, %v121
    %v135 = vpop.permute.xlu0 %134
    %138 = vset.pattern.permute.xlu0 0
    %139 = vperm.xlu0 %138, %v122
    %v140 = vpop.permute.xlu0 %139
    %143 = vset.pattern.permute.xlu0 0
    %144 = vperm.xlu0 %143, %v123
    %v145 = vpop.permute.xlu0 %144
    %v147 = vlaneseq
    %v148 = vshrl.u32 %v147, 7
    %v149 = vsub.s32 0, %v148
    %v150 = vrot.slane %v126, %v149
    %v151 = vmul.f32 %v130, %v150
    %v152 = vmul.f32 %v135, %v150
    %v153 = vmul.f32 %v140, %v150
    %v154 = vmul.f32 %v145, %v150
    %vm159 = vcmask 1043456
    %v160 = vrot.slane %v151, 4
    %v161 = vrot.slane %v152, 4
    %v162 = vsel %vm159, %v160, %v161
    %v163 = vrot.slane %v153, 4
    %v164 = vsel %vm159, %v161, %v163
    %v165 = vrot.slane %v154, 4
    %v166 = vsel %vm159, %v163, %v165
    %v170 = vadd.f32 %v113, %v162
    %v171 = vadd.f32 %v114, %v164
    %v172 = vadd.f32 %v115, %v166
    %v173 = vld [vmem:[%s2] sm:$0x1]
    %v175 = vlaneseq
    %v176 = vshrl.u32 %v175, 7
    %v177 = vsub.s32 0, %v176
    %v178 = vrot.slane %v173, %v177
    %v180 = vadd.f32 %v170, %v178
    %v181 = vadd.f32 %v171, %v178
    %v182 = vadd.f32 %v172, %v178
    %vm183 = vcmp.ge.s32.totalorder %v23, 6
    %vm184 = vcmp.ge.s32.totalorder %v24, 6
    %vm185 = vcmp.ge.s32.totalorder %v25, 6
    %vm186 = vcmp.lt.s32.totalorder %v23, 24
    %vm187 = vcmp.lt.s32.totalorder %v24, 24
    %vm188 = vcmp.lt.s32.totalorder %v25, 24
    %vm189 = vmand %vm183, %vm186
    %vm190 = vmand %vm184, %vm187
    %vm191 = vmand %vm185, %vm188
    %v192 = vsel %vm189, 1, 0
    %v193 = vsel %vm190, 1, 0
    %v194 = vsel %vm191, 1, 0
    %vm195 = vcmp.eq.s32.totalorder %v192, 1
    %vm196 = vcmp.eq.s32.totalorder %v193, 1
    %vm197 = vcmp.eq.s32.totalorder %v194, 1
    %v198 = vsel %vm195, %v180, 0.0
    %v199 = vsel %vm196, %v181, 0.0
    %v200 = vsel %vm197, %v182, 0.0
    %v201 = vpack.c.bf16 %v199, %v198
    %v202 = vpack.c.bf16 %v200, %v200
    %v205 = vunpack.c.l.b16 %v201
    %v206 = vunpack.c.h.b16 %v201
    %v207 = vunpack.c.l.b16 %v202
    %v208 = vpack.c.b16 %v205, %v205
    %v209 = vpack.c.b16 %v206, %v206
    %v210 = vpack.c.b16 %v207, %v207
    %vm214 = vcmask 60416
    %215 = vst.msk [vmem:[#allocation2] sm:$0xf] %vm214, %v208
    %216 = vst.msk [vmem:[#allocation2 + $0x4] sm:$0xf] %vm214, %v209
    %217 = vst.msk [vmem:[#allocation2 + $0x8] sm:$0xf] %vm214, %v210
    %v218 = vld [vmem:[%s0 + $0xc] sm:$0x8]
    %v219 = vld [vmem:[%s0 + $0x10] sm:$0xf]
    %v220 = vld [vmem:[%s0 + $0x14] sm:$0xf]
    %v221 = vld [vmem:[%s0 + $0x18] sm:$0x7]
    %v222 = vunpack.c.l.bf16 %v218
    %v223 = vunpack.c.l.bf16 %v219
    %v224 = vunpack.c.l.bf16 %v220
    %v225 = vunpack.c.l.bf16 %v221
    %v226 = vld [vmem:[%s1] sm:$0x1]
    %v227 = vunpack.c.l.bf16 %v226
    %229 = vset.pattern.permute.xlu0 0
    %230 = vperm.xlu0 %229, %v222
    %v231 = vpop.permute.xlu0 %230
    %234 = vset.pattern.permute.xlu0 0
    %235 = vperm.xlu0 %234, %v223
    %v236 = vpop.permute.xlu0 %235
    %239 = vset.pattern.permute.xlu0 0
    %240 = vperm.xlu0 %239, %v224
    %v241 = vpop.permute.xlu0 %240
    %244 = vset.pattern.permute.xlu0 0
    %245 = vperm.xlu0 %244, %v225
    %v246 = vpop.permute.xlu0 %245
    %v248 = vlaneseq
    %v249 = vshrl.u32 %v248, 7
    %v250 = vsub.s32 0, %v249
    %v251 = vrot.slane %v227, %v250
    %v252 = vmul.f32 %v231, %v251
    %v253 = vmul.f32 %v236, %v251
    %v254 = vmul.f32 %v241, %v251
    %v255 = vmul.f32 %v246, %v251
    %v256 = vadd.f32 %v252, 0.0
    %v257 = vadd.f32 %v253, 0.0
    %v258 = vadd.f32 %v254, 0.0
    %v259 = vadd.f32 %v255, 0.0
    %v260 = vld [vmem:[%s0 + $0x1c] sm:$0xc]
    %v261 = vld [vmem:[%s0 + $0x20] sm:$0xf]
    %v262 = vld [vmem:[%s0 + $0x24] sm:$0xf]
    %v263 = vld [vmem:[%s0 + $0x28] sm:$0x3]
    %v264 = vunpack.c.l.bf16 %v260
    %v265 = vunpack.c.l.bf16 %v261
    %v266 = vunpack.c.l.bf16 %v262
    %v267 = vunpack.c.l.bf16 %v263
    %v268 = vld [vmem:[%s67] sm:$0x1]
    %v269 = vunpack.c.l.bf16 %v268
    %271 = vset.pattern.permute.xlu0 0
    %272 = vperm.xlu0 %271, %v264
    %v273 = vpop.permute.xlu0 %272
    %276 = vset.pattern.permute.xlu0 0
    %277 = vperm.xlu0 %276, %v265
    %v278 = vpop.permute.xlu0 %277
    %281 = vset.pattern.permute.xlu0 0
    %282 = vperm.xlu0 %281, %v266
    %v283 = vpop.permute.xlu0 %282
    %286 = vset.pattern.permute.xlu0 0
    %287 = vperm.xlu0 %286, %v267
    %v288 = vpop.permute.xlu0 %287
    %v290 = vlaneseq
    %v291 = vshrl.u32 %v290, 7
    %v292 = vsub.s32 0, %v291
    %v293 = vrot.slane %v269, %v292
    %v294 = vmul.f32 %v273, %v293
    %v295 = vmul.f32 %v278, %v293
    %v296 = vmul.f32 %v283, %v293
    %v297 = vmul.f32 %v288, %v293
    %v302 = vrot.slane %v294, 6
    %v303 = vrot.slane %v295, 6
    %v304 = vsel %vm102, %v302, %v303
    %v305 = vrot.slane %v296, 6
    %v306 = vsel %vm102, %v303, %v305
    %v307 = vrot.slane %v297, 6
    %v308 = vsel %vm102, %v305, %v307
    %v313 = vadd.f32 %v256, %v302
    %v314 = vadd.f32 %v257, %v304
    %v315 = vadd.f32 %v258, %v306
    %v316 = vadd.f32 %v259, %v308
    %v317 = vld [vmem:[%s0] sm:$0x8]
    %v318 = vld [vmem:[%s0 + $0x4] sm:$0xf]
    %v319 = vld [vmem:[%s0 + $0x8] sm:$0xf]
    %v320 = vld [vmem:[%s0 + $0xc] sm:$0x7]
    %v321 = vunpack.c.l.bf16 %v317
    %v322 = vunpack.c.l.bf16 %v318
    %v323 = vunpack.c.l.bf16 %v319
    %v324 = vunpack.c.l.bf16 %v320
    %v325 = vld [vmem:[%s124] sm:$0x1]
    %v326 = vunpack.c.l.bf16 %v325
    %328 = vset.pattern.permute.xlu0 0
    %329 = vperm.xlu0 %328, %v321
    %v330 = vpop.permute.xlu0 %329
    %333 = vset.pattern.permute.xlu0 0
    %334 = vperm.xlu0 %333, %v322
    %v335 = vpop.permute.xlu0 %334
    %338 = vset.pattern.permute.xlu0 0
    %339 = vperm.xlu0 %338, %v323
    %v340 = vpop.permute.xlu0 %339
    %343 = vset.pattern.permute.xlu0 0
    %344 = vperm.xlu0 %343, %v324
    %v345 = vpop.permute.xlu0 %344
    %v347 = vlaneseq
    %v348 = vshrl.u32 %v347, 7
    %v349 = vsub.s32 0, %v348
    %v350 = vrot.slane %v326, %v349
    %v351 = vmul.f32 %v330, %v350
    %v352 = vmul.f32 %v335, %v350
    %v353 = vmul.f32 %v340, %v350
    %v354 = vmul.f32 %v345, %v350
    %v355 = vadd.f32 %v313, %v351
    %v356 = vadd.f32 %v314, %v352
    %v357 = vadd.f32 %v315, %v353
    %v358 = vadd.f32 %v316, %v354
    %v359 = vld [vmem:[%s2] sm:$0x1]
    %v361 = vlaneseq
    %v362 = vshrl.u32 %v361, 7
    %v363 = vsub.s32 0, %v362
    %v364 = vrot.slane %v359, %v363
    %v366 = vadd.f32 %v355, %v364
    %v367 = vadd.f32 %v356, %v364
    %v368 = vadd.f32 %v357, %v364
    %v369 = vadd.f32 %v358, %v364
    %vm370 = vcmp.lt.s32.totalorder %v23, 18
    %vm371 = vcmp.lt.s32.totalorder %v24, 18
    %vm372 = vcmp.lt.s32.totalorder %v25, 18
    %vm373 = vmand %vm183, %vm370
    %vm374 = vmand %vm184, %vm371
    %vm375 = vmand %vm185, %vm372
    %v376 = vsel %vm373, 1, 0
    %v377 = vsel %vm374, 1, 0
    %v378 = vsel %vm375, 1, 0
    %vm379 = vcmp.eq.s32.totalorder %v376, 1
    %vm380 = vcmp.eq.s32.totalorder %v377, 1
    %vm381 = vcmp.eq.s32.totalorder %v378, 1
    %v386 = vrot.slane %v366, 6
    %v387 = vrot.slane %v367, 6
    %v388 = vsel %vm102, %v386, %v387
    %v389 = vrot.slane %v368, 6
    %v390 = vsel %vm102, %v387, %v389
    %v391 = vrot.slane %v369, 6
    %v392 = vsel %vm102, %v389, %v391
    %v396 = vsel %vm379, %v388, 0.0
    %v397 = vsel %vm380, %v390, 0.0
    %v398 = vsel %vm381, %v392, 0.0
    %v399 = vpack.c.bf16 %v397, %v396
    %v400 = vpack.c.bf16 %v398, %v398
    %v403 = vunpack.c.l.b16 %v399
    %v404 = vunpack.c.h.b16 %v399
    %v405 = vunpack.c.l.b16 %v400
    %v406 = vpack.c.b16 %v403, %v403
    %v407 = vpack.c.b16 %v404, %v404
    %v408 = vpack.c.b16 %v405, %v405
    %412 = vst.msk [vmem:[#allocation2 + $0xc] sm:$0xf] %vm214, %v406
    %413 = vst.msk [vmem:[#allocation2 + $0x10] sm:$0xf] %vm214, %v407
    %414 = vst.msk [vmem:[#allocation2 + $0x14] sm:$0xf] %vm214, %v408
    %v415 = vld [vmem:[%s0 + $0x1c] sm:$0xc]
    %v416 = vld [vmem:[%s0 + $0x20] sm:$0xf]
    %v417 = vld [vmem:[%s0 + $0x24] sm:$0xf]
    %v418 = vld [vmem:[%s0 + $0x28] sm:$0x3]
    %v419 = vunpack.c.l.bf16 %v415
    %v420 = vunpack.c.l.bf16 %v416
    %v421 = vunpack.c.l.bf16 %v417
    %v422 = vunpack.c.l.bf16 %v418
    %v423 = vld [vmem:[%s1] sm:$0x1]
    %v424 = vunpack.c.l.bf16 %v423
    %426 = vset.pattern.permute.xlu0 0
    %427 = vperm.xlu0 %426, %v419
    %v428 = vpop.permute.xlu0 %427
    %431 = vset.pattern.permute.xlu0 0
    %432 = vperm.xlu0 %431, %v420
    %v433 = vpop.permute.xlu0 %432
    %436 = vset.pattern.permute.xlu0 0
    %437 = vperm.xlu0 %436, %v421
    %v438 = vpop.permute.xlu0 %437
    %441 = vset.pattern.permute.xlu0 0
    %442 = vperm.xlu0 %441, %v422
    %v443 = vpop.permute.xlu0 %442
    %v445 = vlaneseq
    %v446 = vshrl.u32 %v445, 7
    %v447 = vsub.s32 0, %v446
    %v448 = vrot.slane %v424, %v447
    %v449 = vmul.f32 %v428, %v448
    %v450 = vmul.f32 %v433, %v448
    %v451 = vmul.f32 %v438, %v448
    %v452 = vmul.f32 %v443, %v448
    %v453 = vadd.f32 %v449, 0.0
    %v454 = vadd.f32 %v450, 0.0
    %v455 = vadd.f32 %v451, 0.0
    %v456 = vadd.f32 %v452, 0.0
    %v457 = vld [vmem:[%s0] sm:$0x8]
    %v458 = vld [vmem:[%s0 + $0x4] sm:$0xf]
    %v459 = vld [vmem:[%s0 + $0x8] sm:$0xf]
    %v460 = vld [vmem:[%s0 + $0xc] sm:$0x7]
    %v461 = vunpack.c.l.bf16 %v457
    %v462 = vunpack.c.l.bf16 %v458
    %v463 = vunpack.c.l.bf16 %v459
    %v464 = vunpack.c.l.bf16 %v460
    %v465 = vld [vmem:[%s67] sm:$0x1]
    %v466 = vunpack.c.l.bf16 %v465
    %468 = vset.pattern.permute.xlu0 0
    %469 = vperm.xlu0 %468, %v461
    %v470 = vpop.permute.xlu0 %469
    %473 = vset.pattern.permute.xlu0 0
    %474 = vperm.xlu0 %473, %v462
    %v475 = vpop.permute.xlu0 %474
    %478 = vset.pattern.permute.xlu0 0
    %479 = vperm.xlu0 %478, %v463
    %v480 = vpop.permute.xlu0 %479
    %483 = vset.pattern.permute.xlu0 0
    %484 = vperm.xlu0 %483, %v464
    %v485 = vpop.permute.xlu0 %484
    %v487 = vlaneseq
    %v488 = vshrl.u32 %v487, 7
    %v489 = vsub.s32 0, %v488
    %v490 = vrot.slane %v466, %v489
    %v491 = vmul.f32 %v470, %v490
    %v492 = vmul.f32 %v475, %v490
    %v493 = vmul.f32 %v480, %v490
    %v494 = vmul.f32 %v485, %v490
    %vm499 = vcmask 1045504
    %v500 = vrot.slane %v491, 2
    %v501 = vrot.slane %v492, 2
    %v502 = vsel %vm499, %v500, %v501
    %v503 = vrot.slane %v493, 2
    %v504 = vsel %vm499, %v501, %v503
    %v505 = vrot.slane %v494, 2
    %v506 = vsel %vm499, %v503, %v505
    %v511 = vadd.f32 %v453, %v502
    %v512 = vadd.f32 %v454, %v504
    %v513 = vadd.f32 %v455, %v506
    %v514 = vadd.f32 %v456, %v505
    %v515 = vld [vmem:[%s0 + $0x10] sm:$0xc]
    %v516 = vld [vmem:[%s0 + $0x14] sm:$0xf]
    %v517 = vld [vmem:[%s0 + $0x18] sm:$0xf]
    %v518 = vld [vmem:[%s0 + $0x1c] sm:$0x3]
    %v519 = vunpack.c.l.bf16 %v515
    %v520 = vunpack.c.l.bf16 %v516
    %v521 = vunpack.c.l.bf16 %v517
    %v522 = vunpack.c.l.bf16 %v518
    %v523 = vld [vmem:[%s124] sm:$0x1]
    %v524 = vunpack.c.l.bf16 %v523
    %526 = vset.pattern.permute.xlu0 0
    %527 = vperm.xlu0 %526, %v519
    %v528 = vpop.permute.xlu0 %527
    %531 = vset.pattern.permute.xlu0 0
    %532 = vperm.xlu0 %531, %v520
    %v533 = vpop.permute.xlu0 %532
    %536 = vset.pattern.permute.xlu0 0
    %537 = vperm.xlu0 %536, %v521
    %v538 = vpop.permute.xlu0 %537
    %541 = vset.pattern.permute.xlu0 0
    %542 = vperm.xlu0 %541, %v522
    %v543 = vpop.permute.xlu0 %542
    %v545 = vlaneseq
    %v546 = vshrl.u32 %v545, 7
    %v547 = vsub.s32 0, %v546
    %v548 = vrot.slane %v524, %v547
    %v549 = vmul.f32 %v528, %v548
    %v550 = vmul.f32 %v533, %v548
    %v551 = vmul.f32 %v538, %v548
    %v552 = vmul.f32 %v543, %v548
    %v553 = vadd.f32 %v511, %v549
    %v554 = vadd.f32 %v512, %v550
    %v555 = vadd.f32 %v513, %v551
    %v556 = vadd.f32 %v514, %v552
    %v557 = vld [vmem:[%s2] sm:$0x1]
    %v559 = vlaneseq
    %v560 = vshrl.u32 %v559, 7
    %v561 = vsub.s32 0, %v560
    %v562 = vrot.slane %v557, %v561
    %v564 = vadd.f32 %v553, %v562
    %v565 = vadd.f32 %v554, %v562
    %v566 = vadd.f32 %v555, %v562
    %v567 = vadd.f32 %v556, %v562
    %vm568 = vcmp.ge.s32.totalorder %v23, 0
    %vm569 = vcmp.ge.s32.totalorder %v24, 0
    %vm570 = vcmp.ge.s32.totalorder %v25, 0
    %vm571 = vmand %vm568, %vm370
    %vm572 = vmand %vm569, %vm371
    %vm573 = vmand %vm570, %vm372
    %v574 = vsel %vm571, 1, 0
    %v575 = vsel %vm572, 1, 0
    %v576 = vsel %vm573, 1, 0
    %vm577 = vcmp.eq.s32.totalorder %v574, 1
    %vm578 = vcmp.eq.s32.totalorder %v575, 1
    %vm579 = vcmp.eq.s32.totalorder %v576, 1
    %v584 = vrot.slane %v564, 4
    %v585 = vrot.slane %v565, 4
    %v586 = vsel %vm159, %v584, %v585
    %v587 = vrot.slane %v566, 4
    %v588 = vsel %vm159, %v585, %v587
    %v589 = vrot.slane %v567, 4
    %v590 = vsel %vm159, %v587, %v589
    %v594 = vsel %vm577, %v586, 0.0
    %v595 = vsel %vm578, %v588, 0.0
    %v596 = vsel %vm579, %v590, 0.0
    %v597 = vpack.c.bf16 %v595, %v594
    %v598 = vpack.c.bf16 %v596, %v596
    %v601 = vunpack.c.l.b16 %v597
    %v602 = vunpack.c.h.b16 %v597
    %v603 = vunpack.c.l.b16 %v598
    %v604 = vpack.c.b16 %v601, %v601
    %v605 = vpack.c.b16 %v602, %v602
    %v606 = vpack.c.b16 %v603, %v603
    %610 = vst.msk [vmem:[#allocation2 + $0x18] sm:$0xf] %vm214, %v604
    %611 = vst.msk [vmem:[#allocation2 + $0x1c] sm:$0xf] %vm214, %v605
    %612 = vst.msk [vmem:[#allocation2 + $0x20] sm:$0xf] %vm214, %v606
    %v613 = vld [vmem:[#allocation2] sm:$0xf]
    %v614 = vld [vmem:[#allocation2 + $0x4] sm:$0xf]
    %v615 = vld [vmem:[#allocation2 + $0x8] sm:$0x1]
    %v616 = vld [vmem:[%s3] sm:$0xf]
    %v617 = vld [vmem:[#allocation2 + $0xc] sm:$0xf]
    %v618 = vld [vmem:[#allocation2 + $0x10] sm:$0xf]
    %v619 = vld [vmem:[#allocation2 + $0x14] sm:$0x1]
    %s620 = scalar_lea.vmem %s3, 4
    %v621 = vld [vmem:[%s620] sm:$0xf]
    %v625 = vunpack.c.l.b16 %v617
    %v626 = vunpack.c.l.b16 %v618
    %v627 = vunpack.c.l.b16 %v619
    %v628 = vpack.c.b16 %v626, %v625
    %v629 = vpack.c.b16 %v627, %v627
    %vm630 = vcmask 64512
    %v632 = vsel %vm630, %v628, 0
    %v635 = vsel %vm630, %v629, 0
    %v638 = vsel %vm159, %v621, 0
    %640 = vmatprep.subr.bf16.mxu0 0
    %641 = vmatpush1.bf16.msra.mxu0 %v638
    %642 = vmatprep.subr.bf16.mxu0 0
    %643 = vmatpush1.bf16.msra.mxu0 0
    %644 = vmatprep.subr.bf16.mxu0 0
    %645 = vmatpush1.bf16.msra.mxu0 0
    %646 = vmatprep.subr.bf16.mxu0 0
    %647 = vmatpush1.bf16.msra.mxu0 0
    %648 = vmatprep.subr.bf16.mxu0 0
    %649 = vmatpush1.bf16.msra.mxu0 0
    %650 = vmatprep.subr.bf16.mxu0 0
    %651 = vmatpush1.bf16.msra.mxu0 0
    %652 = vmatprep.subr.bf16.mxu0 0
    %653 = vmatpush1.bf16.msra.mxu0 0
    %654 = vmatprep.subr.bf16.mxu0 0
    %655 = vmatpush1.bf16.msra.mxu0 0
    %656 = vmatprep.subr.bf16.mxu0 0
    %657 = vmatpush1.bf16.msra.mxu0 0
    %658 = vmatprep.subr.bf16.mxu0 0
    %659 = vmatpush1.bf16.msra.mxu0 0
    %660 = vmatprep.subr.bf16.mxu0 0
    %661 = vmatpush1.bf16.msra.mxu0 0
    %662 = vmatprep.subr.bf16.mxu0 0
    %663 = vmatpush1.bf16.msra.mxu0 0
    %664 = vmatprep.subr.bf16.mxu0 0
    %665 = vmatpush1.bf16.msra.mxu0 0
    %666 = vmatprep.subr.bf16.mxu0 0
    %667 = vmatpush1.bf16.msra.mxu0 0
    %668 = vmatprep.subr.bf16.mxu0 0
    %669 = vmatpush1.bf16.msra.mxu0 0
    %670 = vmatprep.subr.bf16.mxu0 0
    %671 = vmatpush1.bf16.msra.mxu0 0
    %672 = vmatprep.mubr.bf16.mxu0 0
    %673 = vmatmul.mubr.bf16.gmra.mrb[0].mxu0 %v632
    %v674 = vpop.f32.mrb[0].mxu0
    %v675 = vadd.f32 0.0, %v674
    %v676 = vpop.f32.mrb[0].mxu0
    %v677 = vpop.f32.mrb[0].mxu0
    %v678 = vadd.f32 0.0, %v677
    %v679 = vpop.f32.mrb[0].mxu0
    %680 = vmatprep.mubr.bf16.mxu0 0
    %681 = vmatmul.mubr.bf16.gmra.mrb[0].mxu0 %v635
    %v682 = vpop.f32.mrb[0].mxu0
    %v683 = vadd.f32 0.0, %v682
    %v684 = vpop.f32.mrb[0].mxu0
    %v685 = vpop.f32.mrb[0].mxu0
    %v686 = vpop.f32.mrb[0].mxu0
    %687 = vdwg.mxu0
    %v691 = vunpack.c.l.b16 %v613
    %v692 = vunpack.c.l.b16 %v614
    %v693 = vunpack.c.l.b16 %v615
    %v694 = vpack.c.b16 %v692, %v691
    %v695 = vpack.c.b16 %v693, %v693
    %v697 = vsel %vm630, %v694, 0
    %v700 = vsel %vm630, %v695, 0
    %v703 = vsel %vm159, %v616, 0
    %705 = vmatprep.subr.bf16.mxu0 0
    %706 = vmatpush1.bf16.msra.mxu0 %v703
    %707 = vmatprep.subr.bf16.mxu0 0
    %708 = vmatpush1.bf16.msra.mxu0 0
    %709 = vmatprep.subr.bf16.mxu0 0
    %710 = vmatpush1.bf16.msra.mxu0 0
    %711 = vmatprep.subr.bf16.mxu0 0
    %712 = vmatpush1.bf16.msra.mxu0 0
    %713 = vmatprep.subr.bf16.mxu0 0
    %714 = vmatpush1.bf16.msra.mxu0 0
    %715 = vmatprep.subr.bf16.mxu0 0
    %716 = vmatpush1.bf16.msra.mxu0 0
    %717 = vmatprep.subr.bf16.mxu0 0
    %718 = vmatpush1.bf16.msra.mxu0 0
    %719 = vmatprep.subr.bf16.mxu0 0
    %720 = vmatpush1.bf16.msra.mxu0 0
    %721 = vmatprep.subr.bf16.mxu0 0
    %722 = vmatpush1.bf16.msra.mxu0 0
    %723 = vmatprep.subr.bf16.mxu0 0
    %724 = vmatpush1.bf16.msra.mxu0 0
    %725 = vmatprep.subr.bf16.mxu0 0
    %726 = vmatpush1.bf16.msra.mxu0 0
    %727 = vmatprep.subr.bf16.mxu0 0
    %728 = vmatpush1.bf16.msra.mxu0 0
    %729 = vmatprep.subr.bf16.mxu0 0
    %730 = vmatpush1.bf16.msra.mxu0 0
    %731 = vmatprep.subr.bf16.mxu0 0
    %732 = vmatpush1.bf16.msra.mxu0 0
    %733 = vmatprep.subr.bf16.mxu0 0
    %734 = vmatpush1.bf16.msra.mxu0 0
    %735 = vmatprep.subr.bf16.mxu0 0
    %736 = vmatpush1.bf16.msra.mxu0 0
    %737 = vmatprep.mubr.bf16.mxu0 0
    %738 = vmatmul.mubr.bf16.gmra.mrb[0].mxu0 %v697
    %v739 = vpop.f32.mrb[0].mxu0
    %v740 = vadd.f32 %v675, %v739
    %v741 = vpop.f32.mrb[0].mxu0
    %v742 = vpop.f32.mrb[0].mxu0
    %v743 = vadd.f32 %v678, %v742
    %v744 = vpop.f32.mrb[0].mxu0
    %745 = vmatprep.mubr.bf16.mxu0 0
    %746 = vmatmul.mubr.bf16.gmra.mrb[0].mxu0 %v700
    %v747 = vpop.f32.mrb[0].mxu0
    %v748 = vadd.f32 %v683, %v747
    %v749 = vpop.f32.mrb[0].mxu0
    %v750 = vpop.f32.mrb[0].mxu0
    %v751 = vpop.f32.mrb[0].mxu0
    %752 = vdwg.mxu0
    %v753 = vld [vmem:[#allocation2 + $0x18] sm:$0xf]
    %v754 = vld [vmem:[#allocation2 + $0x1c] sm:$0xf]
    %v755 = vld [vmem:[#allocation2 + $0x20] sm:$0x1]
    %s756 = scalar_lea.vmem %s3, 8
    %v757 = vld [vmem:[%s756] sm:$0xf]
    %v761 = vunpack.c.l.b16 %v753
    %v762 = vunpack.c.l.b16 %v754
    %v763 = vunpack.c.l.b16 %v755
    %v764 = vpack.c.b16 %v762, %v761
    %v765 = vpack.c.b16 %v763, %v763
    %v767 = vsel %vm630, %v764, 0
    %v770 = vsel %vm630, %v765, 0
    %v773 = vsel %vm159, %v757, 0
    %775 = vmatprep.subr.bf16.mxu0 0
    %776 = vmatpush1.bf16.msra.mxu0 %v773
    %777 = vmatprep.subr.bf16.mxu0 0
    %778 = vmatpush1.bf16.msra.mxu0 0
    %779 = vmatprep.subr.bf16.mxu0 0
    %780 = vmatpush1.bf16.msra.mxu0 0
    %781 = vmatprep.subr.bf16.mxu0 0
    %782 = vmatpush1.bf16.msra.mxu0 0
    %783 = vmatprep.subr.bf16.mxu0 0
    %784 = vmatpush1.bf16.msra.mxu0 0
    %785 = vmatprep.subr.bf16.mxu0 0
    %786 = vmatpush1.bf16.msra.mxu0 0
    %787 = vmatprep.subr.bf16.mxu0 0
    %788 = vmatpush1.bf16.msra.mxu0 0
    %789 = vmatprep.subr.bf16.mxu0 0
    %790 = vmatpush1.bf16.msra.mxu0 0
    %791 = vmatprep.subr.bf16.mxu0 0
    %792 = vmatpush1.bf16.msra.mxu0 0
    %793 = vmatprep.subr.bf16.mxu0 0
    %794 = vmatpush1.bf16.msra.mxu0 0
    %795 = vmatprep.subr.bf16.mxu0 0
    %796 = vmatpush1.bf16.msra.mxu0 0
    %797 = vmatprep.subr.bf16.mxu0 0
    %798 = vmatpush1.bf16.msra.mxu0 0
    %799 = vmatprep.subr.bf16.mxu0 0
    %800 = vmatpush1.bf16.msra.mxu0 0
    %801 = vmatprep.subr.bf16.mxu0 0
    %802 = vmatpush1.bf16.msra.mxu0 0
    %803 = vmatprep.subr.bf16.mxu0 0
    %804 = vmatpush1.bf16.msra.mxu0 0
    %805 = vmatprep.subr.bf16.mxu0 0
    %806 = vmatpush1.bf16.msra.mxu0 0
    %807 = vmatprep.mubr.bf16.mxu0 0
    %808 = vmatmul.mubr.bf16.gmra.mrb[0].mxu0 %v767
    %v809 = vpop.f32.mrb[0].mxu0
    %v810 = vadd.f32 0.0, %v809
    %v811 = vpop.f32.mrb[0].mxu0
    %v812 = vpop.f32.mrb[0].mxu0
    %v813 = vadd.f32 0.0, %v812
    %v814 = vpop.f32.mrb[0].mxu0
    %815 = vmatprep.mubr.bf16.mxu0 0
    %816 = vmatmul.mubr.bf16.gmra.mrb[0].mxu0 %v770
    %v817 = vpop.f32.mrb[0].mxu0
    %v818 = vadd.f32 0.0, %v817
    %v819 = vpop.f32.mrb[0].mxu0
    %v820 = vpop.f32.mrb[0].mxu0
    %v821 = vpop.f32.mrb[0].mxu0
    %822 = vdwg.mxu0
    %v823 = vadd.f32 %v740, %v810
    %v824 = vadd.f32 %v743, %v813
    %v825 = vadd.f32 %v748, %v818
    %v826 = vld [vmem:[#allocation2] sm:$0x8]
    %v827 = vld [vmem:[#allocation2 + $0x8] sm:$0xf]
    %s828 = scalar_lea.vmem %s3, 12
    %v829 = vld [vmem:[%s828] sm:$0xf]
    %v832 = vunpack.c.l.b16 %v826
    %v833 = vunpack.c.l.b16 %v827
    %v834 = vpack.c.b16 %v692, %v832
    %v835 = vpack.c.b16 %v833, %v833
    %vm836 = vcmask 1044480
    %v837 = vrot.slane %v834, 3
    %v838 = vrot.slane %v835, 3
    %v839 = vsel %vm836, %v837, %v838
    %v841 = vsel %vm630, %v839, 0
    %v844 = vsel %vm630, %v838, 0
    %v847 = vsel %vm159, %v829, 0
    %849 = vmatprep.subr.bf16.mxu0 0
    %850 = vmatpush1.bf16.msra.mxu0 %v847
    %851 = vmatprep.subr.bf16.mxu0 0
    %852 = vmatpush1.bf16.msra.mxu0 0
    %853 = vmatprep.subr.bf16.mxu0 0
    %854 = vmatpush1.bf16.msra.mxu0 0
    %855 = vmatprep.subr.bf16.mxu0 0
    %856 = vmatpush1.bf16.msra.mxu0 0
    %857 = vmatprep.subr.bf16.mxu0 0
    %858 = vmatpush1.bf16.msra.mxu0 0
    %859 = vmatprep.subr.bf16.mxu0 0
    %860 = vmatpush1.bf16.msra.mxu0 0
    %861 = vmatprep.subr.bf16.mxu0 0
    %862 = vmatpush1.bf16.msra.mxu0 0
    %863 = vmatprep.subr.bf16.mxu0 0
    %864 = vmatpush1.bf16.msra.mxu0 0
    %865 = vmatprep.subr.bf16.mxu0 0
    %866 = vmatpush1.bf16.msra.mxu0 0
    %867 = vmatprep.subr.bf16.mxu0 0
    %868 = vmatpush1.bf16.msra.mxu0 0
    %869 = vmatprep.subr.bf16.mxu0 0
    %870 = vmatpush1.bf16.msra.mxu0 0
    %871 = vmatprep.subr.bf16.mxu0 0
    %872 = vmatpush1.bf16.msra.mxu0 0
    %873 = vmatprep.subr.bf16.mxu0 0
    %874 = vmatpush1.bf16.msra.mxu0 0
    %875 = vmatprep.subr.bf16.mxu0 0
    %876 = vmatpush1.bf16.msra.mxu0 0
    %877 = vmatprep.subr.bf16.mxu0 0
    %878 = vmatpush1.bf16.msra.mxu0 0
    %879 = vmatprep.subr.bf16.mxu0 0
    %880 = vmatpush1.bf16.msra.mxu0 0
    %881 = vmatprep.mubr.bf16.mxu0 0
    %882 = vmatmul.mubr.bf16.gmra.mrb[0].mxu0 %v841
    %v883 = vpop.f32.mrb[0].mxu0
    %v884 = vadd.f32 0.0, %v883
    %v885 = vpop.f32.mrb[0].mxu0
    %v886 = vpop.f32.mrb[0].mxu0
    %v887 = vadd.f32 0.0, %v886
    %v888 = vpop.f32.mrb[0].mxu0
    %889 = vmatprep.mubr.bf16.mxu0 0
    %890 = vmatmul.mubr.bf16.gmra.mrb[0].mxu0 %v844
    %v891 = vpop.f32.mrb[0].mxu0
    %v892 = vadd.f32 0.0, %v891
    %v893 = vpop.f32.mrb[0].mxu0
    %v894 = vpop.f32.mrb[0].mxu0
    %v895 = vpop.f32.mrb[0].mxu0
    %896 = vdwg.mxu0
    %v897 = vadd.f32 %v823, %v884
    %v898 = vadd.f32 %v824, %v887
    %v899 = vadd.f32 %v825, %v892
    %v900 = vld [vmem:[#allocation2 + $0xc] sm:$0x8]
    %v901 = vld [vmem:[#allocation2 + $0x14] sm:$0xf]
    %s902 = scalar_lea.vmem %s3, 16
    %v903 = vld [vmem:[%s902] sm:$0xf]
    %v906 = vunpack.c.l.b16 %v900
    %v907 = vunpack.c.l.b16 %v901
    %v908 = vpack.c.b16 %v626, %v906
    %v909 = vpack.c.b16 %v907, %v907
    %v910 = vrot.slane %v908, 3
    %v911 = vrot.slane %v909, 3
    %v912 = vsel %vm836, %v910, %v911
    %v914 = vsel %vm630, %v912, 0
    %v917 = vsel %vm630, %v911, 0
    %v920 = vsel %vm159, %v903, 0
    %922 = vmatprep.subr.bf16.mxu0 0
    %923 = vmatpush1.bf16.msra.mxu0 %v920
    %924 = vmatprep.subr.bf16.mxu0 0
    %925 = vmatpush1.bf16.msra.mxu0 0
    %926 = vmatprep.subr.bf16.mxu0 0
    %927 = vmatpush1.bf16.msra.mxu0 0
    %928 = vmatprep.subr.bf16.mxu0 0
    %929 = vmatpush1.bf16.msra.mxu0 0
    %930 = vmatprep.subr.bf16.mxu0 0
    %931 = vmatpush1.bf16.msra.mxu0 0
    %932 = vmatprep.subr.bf16.mxu0 0
    %933 = vmatpush1.bf16.msra.mxu0 0
    %934 = vmatprep.subr.bf16.mxu0 0
    %935 = vmatpush1.bf16.msra.mxu0 0
    %936 = vmatprep.subr.bf16.mxu0 0
    %937 = vmatpush1.bf16.msra.mxu0 0
    %938 = vmatprep.subr.bf16.mxu0 0
    %939 = vmatpush1.bf16.msra.mxu0 0
    %940 = vmatprep.subr.bf16.mxu0 0
    %941 = vmatpush1.bf16.msra.mxu0 0
    %942 = vmatprep.subr.bf16.mxu0 0
    %943 = vmatpush1.bf16.msra.mxu0 0
    %944 = vmatprep.subr.bf16.mxu0 0
    %945 = vmatpush1.bf16.msra.mxu0 0
    %946 = vmatprep.subr.bf16.mxu0 0
    %947 = vmatpush1.bf16.msra.mxu0 0
    %948 = vmatprep.subr.bf16.mxu0 0
    %949 = vmatpush1.bf16.msra.mxu0 0
    %950 = vmatprep.subr.bf16.mxu0 0
    %951 = vmatpush1.bf16.msra.mxu0 0
    %952 = vmatprep.subr.bf16.mxu0 0
    %953 = vmatpush1.bf16.msra.mxu0 0
    %954 = vmatprep.mubr.bf16.mxu0 0
    %955 = vmatmul.mubr.bf16.gmra.mrb[0].mxu0 %v914
    %v956 = vpop.f32.mrb[0].mxu0
    %v957 = vadd.f32 0.0, %v956
    %v958 = vpop.f32.mrb[0].mxu0
    %v959 = vpop.f32.mrb[0].mxu0
    %v960 = vadd.f32 0.0, %v959
    %v961 = vpop.f32.mrb[0].mxu0
    %962 = vmatprep.mubr.bf16.mxu0 0
    %963 = vmatmul.mubr.bf16.gmra.mrb[0].mxu0 %v917
    %v964 = vpop.f32.mrb[0].mxu0
    %v965 = vadd.f32 0.0, %v964
    %v966 = vpop.f32.mrb[0].mxu0
    %v967 = vpop.f32.mrb[0].mxu0
    %v968 = vpop.f32.mrb[0].mxu0
    %969 = vdwg.mxu0
    %v970 = vadd.f32 %v897, %v957
    %v971 = vadd.f32 %v898, %v960
    %v972 = vadd.f32 %v899, %v965
    %v973 = vld [vmem:[%s4] sm:$0x1]
    %v975 = vlaneseq
    %v976 = vshrl.u32 %v975, 7
    %v977 = vsub.s32 0, %v976
    %v978 = vrot.slane %v973, %v977
    %v980 = vadd.f32 %v970, %v978
    %v981 = vadd.f32 %v971, %v978
    %v982 = vadd.f32 %v972, %v978
    %vm983 = vcmp.ge.f32.partialorder %v980, 0.0
    %vm984 = vcmp.ge.f32.partialorder %v981, 0.0
    %vm985 = vcmp.ge.f32.partialorder %v982, 0.0
    %v986 = vmul.f32 %v980, 0.1
    %v987 = vmul.f32 %v981, 0.1
    %v988 = vmul.f32 %v982, 0.1
    %v989 = vsel %vm983, %v980, %v986
    %v990 = vsel %vm984, %v981, %v987
    %v991 = vsel %vm985, %v982, %v988
    %v992 = vpack.c.bf16 %v990, %v989
    %v993 = vpack.c.bf16 %v991, %v991
    %v996 = vunpack.c.l.b16 %v992
    %v997 = vunpack.c.h.b16 %v992
    %v998 = vunpack.c.l.b16 %v993
    %v999 = vpack.c.b16 %v996, %v996
    %v1000 = vpack.c.b16 %v997, %v997
    %v1001 = vpack.c.b16 %v998, %v998
    %vm1005 = vcmask 257024
    %1006 = vst.msk [vmem:[#allocation3] sm:$0xf] %vm1005, %v999
    %1007 = vst.msk [vmem:[#allocation3 + $0x4] sm:$0xf] %vm1005, %v1000
    %vm1008 = vcmask 253952
    %1009 = vst.msk [vmem:[#allocation3 + $0x8] sm:$0x1] %vm1008, %v1001
    // Predicated region
    $region22: #{tpu_custom_call.1} parent=1 // pred_check
      _
    $region23: #{tpu_custom_call.1} parent=1 // pred_check_branch
      %1011 = sbr.rel (0) target = $region25
    $region24: #{tpu_custom_call.1} parent=1 // pred_region
      %s1013 = ssub.s32 192, 192
      %1014 = vsyncadd [#allocation4], %s1013
      %s1015 = sshll.u32 [#allocation3], 4
      %s1016 = int_to_ptr.vmem [resolvable:$true] %s1015
      %1021 = dma.vmem_to_hbm [thread:$0]  %s1016, 192, %s5, [#allocation4], 64, 64, 4
    $region25: #{tpu_custom_call.1} parent=1 // pred_fallthru
      _
    // Predicated region
    $region26: #{tpu_custom_call.1} parent=1 // pred_check
      _
    $region27: #{tpu_custom_call.1} parent=1 // pred_check_branch
      %1023 = sbr.rel (0) target = $region29
    $region28: #{tpu_custom_call.1} parent=1 // pred_region
      %1024 = dma.done [#allocation4], 192
    $region29: #{tpu_custom_call.1} parent=1 // pred_fallthru
      _
    %1025 = vsyncpa [#allocation4], 1

</llo_original>
